<compile_context>
chip_gen: v7x
topology: tpu7x:2x2x1
jax: 0.10.0
libtpu: 0.0.40
codegen_flags: <defaults>
</compile_context>

<pallas_src>
import jax
import jax.numpy as jnp
from jax.experimental import pallas as pl
from jax.experimental.pallas import tpu as pltpu

_LANE = 128
# ~4 MiB per block -> 16 MiB double-buffered footprint (in + out).
_TARGET_BLOCK_BYTES = 4 * 1024 * 1024
# Explicit scoped-VMEM limit: valid on v5e/v6e (128 MiB physical) and v7x
# (64 MiB physical, 32 MiB scoped default), with headroom over our 16 MiB.
_VMEM_LIMIT_BYTES = 32 * 1024 * 1024
# Above this size, force >=2 grid blocks so both v7x TensorCores get work.
_MIN_SPLIT_BYTES = 1 * 1024 * 1024


def _sigmoid_kernel(x_ref, o_ref):
    # exp goes to the EUP, the rest to the VPU; kernel stays HBM-bound on
    # v5e/v6e. Exact formula keeps bit-accuracy with the XLA reference.
    o_ref[...] = jax.nn.sigmoid(x_ref[...])


def _sublane_for_dtype(dtype) -> int:
    # Minimum second-to-last tile dim: (8,128) f32, (16,128) bf16, (32,128) int8/fp8.
    itemsize = jnp.dtype(dtype).itemsize
    return {4: 8, 2: 16, 1: 32}.get(itemsize, 8)


def _pick_width(n: int) -> int:
    # Widest lane-dense (multiple-of-128) last dim that evenly divides n.
    for w in (8192, 4096, 2048, 1024, 512, 256, 128):
        if n % w == 0:
            return w
    return _LANE


def _sigmoid_2d(x2d: jax.Array) -> jax.Array:
    rows, width = x2d.shape
    dtype = x2d.dtype
    sublane = _sublane_for_dtype(dtype)
    itemsize = jnp.dtype(dtype).itemsize
    n_elems = rows * width

    # Block rows sized for ~4 MiB per block, rounded to the dtype's sublane multiple.
    block_rows = max(
        sublane, (_TARGET_BLOCK_BYTES // (width * itemsize)) // sublane * sublane
    )
    # Guarantee >=2 grid blocks for tensors past ~1 MiB: with the grid axis
    # marked "parallel" this lets v7x's two TensorCores split the work
    # (harmless on single-TC v5e/v6e).
    if n_elems * itemsize > _MIN_SPLIT_BYTES:
        half_rows = pl.cdiv(pl.cdiv(rows, 2), sublane) * sublane
        block_rows = min(block_rows, half_rows)
    if block_rows >= rows:
        block_rows = rows  # single block (block dim == full dim is legal)
    grid = (pl.cdiv(rows, block_rows),)  # Pallas masks the ragged last block.

    return pl.pallas_call(
        _sigmoid_kernel,
        out_shape=jax.ShapeDtypeStruct((rows, width), dtype),
        grid_spec=pltpu.PrefetchScalarGridSpec(
            num_scalar_prefetch=0,
            grid=grid,
            in_specs=[pl.BlockSpec((block_rows, width), lambda i: (i, 0))],
            out_specs=pl.BlockSpec((block_rows, width), lambda i: (i, 0)),
        ),
        compiler_params=pltpu.CompilerParams(
            dimension_semantics=("parallel",),
            vmem_limit_bytes=_VMEM_LIMIT_BYTES,
        ),
        cost_estimate=pl.CostEstimate(
            flops=4 * n_elems,
            transcendentals=n_elems,
            bytes_accessed=2 * n_elems * itemsize,
        ),
    )(x2d)


def sigmoid_pallas(x: jax.Array) -> jax.Array:
    """Elementwise sigmoid, computed in a Pallas TPU kernel."""
    orig_shape = x.shape
    n = x.size
    if n == 0:
        return x

    if n % _LANE == 0:
        # Common case: pure reshapes (no extra HBM passes in the wrapper).
        width = _pick_width(n)
        out = _sigmoid_2d(x.reshape(n // width, width))
        return out.reshape(orig_shape)

    flat = x.reshape(-1)
    n_main = (n // _LANE) * _LANE
    if n_main == 0:
        # Tiny (<128 elements): pad to one 128-lane row; cost is negligible.
        padded = jnp.pad(flat, (0, _LANE - n))
        out = _sigmoid_2d(padded.reshape(1, _LANE))
        return out.reshape(-1)[:n].reshape(orig_shape)

    # Ragged case, n >= 128: run the fast path on the 128-aligned prefix and
    # the <128-element tail in plain XLA (avoids whole-array pad + slice).
    width = _pick_width(n_main)
    main = _sigmoid_2d(flat[:n_main].reshape(n_main // width, width)).reshape(-1)
    tail = jax.nn.sigmoid(flat[n_main:])
    return jnp.concatenate([main, tail]).reshape(orig_shape)


if __name__ == "__main__":
    key = jax.random.PRNGKey(0)

    # NCHW input, matching the PyTorch module's conventions.
    x = jax.random.normal(key, (2, 4, 16, 16), dtype=jnp.float32)
    y = sigmoid_pallas(x)
    jax.block_until_ready(y)
    y_ref = jax.nn.sigmoid(x)
    assert y.shape == x.shape and y.dtype == x.dtype
    assert jnp.allclose(y, y_ref, atol=1e-6, rtol=1e-6)

    # Ragged, tiny (n < 128) path.
    xr = jax.random.normal(jax.random.PRNGKey(1), (5, 7, 3), dtype=jnp.float32)
    yr = sigmoid_pallas(xr)
    jax.block_until_ready(yr)
    assert jnp.allclose(yr, jax.nn.sigmoid(xr), atol=1e-6, rtol=1e-6)

    # Ragged, n >= 128 path (prefix kernel + XLA tail).
    xr2 = jax.random.normal(jax.random.PRNGKey(2), (3, 50), dtype=jnp.float32)
    yr2 = sigmoid_pallas(xr2)
    jax.block_until_ready(yr2)
    assert jnp.allclose(yr2, jax.nn.sigmoid(xr2), atol=1e-6, rtol=1e-6)

    # Larger tensor (~3 MiB) exercising the >=2-block / multi-step grid path.
    xl = jax.random.normal(jax.random.PRNGKey(3), (1024, 768), dtype=jnp.float32)
    yl = sigmoid_pallas(xl)
    jax.block_until_ready(yl)
    assert jnp.allclose(yl, jax.nn.sigmoid(xl), atol=1e-6, rtol=1e-6)

    # bf16 path (exercises 16-sublane rounding; compute kept in bf16).
    xb = x.astype(jnp.bfloat16)
    yb = sigmoid_pallas(xb)
    jax.block_until_ready(yb)
    assert yb.dtype == jnp.bfloat16
    assert jnp.allclose(
        yb.astype(jnp.float32), jax.nn.sigmoid(xb).astype(jnp.float32),
        atol=1e-2, rtol=1e-2,
    )

    print("KERNEL_OK")
</pallas_src>

<mosaic_0001>
module attributes {stable_mosaic.version = 11 : i64} {
  func.func @_sigmoid_kernel(%arg0: i32, %arg1: memref<1x2048xf32, #tpu.memory_space<vmem>>, %arg2: memref<1x2048xf32, #tpu.memory_space<vmem>>) attributes {dimension_semantics = [#tpu.dimension_semantics<parallel>], iteration_bounds = array<i64: 1>, scalar_prefetch = 0 : i64, scratch_operands = 0 : i64, tpu.core_type = #tpu.core_type<tc>, window_params = [{transform_indices = @transform_0, window_bounds = array<i64: 1, 2048>}, {transform_indices = @transform_1, window_bounds = array<i64: 1, 2048>}]} {
    %c0 = arith.constant 0 : index
    %c0_0 = arith.constant 0 : index
    %0 = vector.load %arg1[%c0, %c0_0] : memref<1x2048xf32, #tpu.memory_space<vmem>>, vector<1x2048xf32>
    %1 = arith.negf %0 : vector<1x2048xf32>
    %2 = math.exp %1 : vector<1x2048xf32>
    %cst = arith.constant 1.000000e+00 : f32
    %3 = vector.broadcast %cst : f32 to vector<1x2048xf32>
    %4 = arith.addf %3, %2 : vector<1x2048xf32>
    %5 = arith.divf %3, %4 : vector<1x2048xf32>
    %c0_1 = arith.constant 0 : index
    %c0_2 = arith.constant 0 : index
    %6 = vector.load %arg2[%c0_1, %c0_2] : memref<1x2048xf32, #tpu.memory_space<vmem>>, vector<1x2048xf32>
    tpu.vector_store %arg2[%c0_1, %c0_2], %5 {strides = array<i32>} : memref<1x2048xf32, #tpu.memory_space<vmem>>, vector<1x2048xf32>,
    return
  }
  func.func @transform_0(%arg0: i32) -> (i32, i32) {
    %c0_i32 = arith.constant 0 : i32
    %c0_i32_0 = arith.constant 0 : i32
    return %arg0, %c0_i32 : i32, i32
  }
  func.func @transform_1(%arg0: i32) -> (i32, i32) {
    %c0_i32 = arith.constant 0 : i32
    %c0_i32_0 = arith.constant 0 : i32
    return %arg0, %c0_i32 : i32, i32
  }
}

</mosaic_0001>

<llo_original>
// kernel: tpu_custom_call.1
$region0: #{tpu_custom_call.1}
  #allocation0 [shape = 'u32[]', space=smem, size = 0x4, offset = 0x4, fixed_abs, tag = 'smem constant byte address 0x4 - core index']
  #allocation1 [shape = 'u32[144,128]{1,0:T(1,128)}', space=vmem, size = 0x12000, scoped, tag = 'internal scratch']
  %s0 = inlined_call_operand.hbm [shape: f32[1,2048], index: 0, kind: input, shape index: {}]
  %s1 = inlined_call_operand.hbm [shape: f32[1,2048], index: 1, kind: output, shape index: {}]
  %s2 = sld [smem:[#allocation0]]
  $region18: #{tpu_custom_call.1} parent=0
    _
  %s4 = ssub.s32 1, %s2
  %s5 = scalar_select 0, %s4, %s2
  $region1: #{tpu_custom_call.1} parent=0
    #allocation2 [shape = 'u8[8192]{0}', space=vmem, size = 0x2000, scoped, tag = 'input window, operand 0, single buffered']
    #allocation3 [shape = 's32[1]{0}', space=sflag, size = 0x4, scoped, tag = 'scoped memory for tpu_custom_call.1']
    #allocation4 [shape = 's32[1]{0}', space=sflag, size = 0x4, scoped, tag = 'scoped memory for tpu_custom_call.1']
    #allocation5 [shape = 'u8[8192]{0}', space=vmem, size = 0x2000, scoped, tag = 'output window, operand 0, single buffered']
    %6 = vsyncpa [#allocation3], 0
    %7 = vsyncpa [#allocation4], 0
    // Predicated region
    $region2: #{tpu_custom_call.1} parent=1 // pred_check
      _
    $region3: #{tpu_custom_call.1} parent=1 // pred_check_branch
      %9 = sbr.rel (0) target = $region5
    $region4: #{tpu_custom_call.1} parent=1 // pred_region
      %s11 = ssub.s32 256, 256
      %12 = vsyncadd [#allocation3], %s11
      %s14 = sshll.u32 [#allocation2], 4
      %s15 = int_to_ptr.vmem [resolvable:$true] %s14
      %17 = dma.hbm_to_vmem [thread:$0]  %s0, 256, %s15, [#allocation3]
    $region5: #{tpu_custom_call.1} parent=1 // pred_fallthru
      _
    // Predicated region
    $region6: #{tpu_custom_call.1} parent=1 // pred_check
      _
    $region7: #{tpu_custom_call.1} parent=1 // pred_check_branch
      %19 = sbr.rel (0) target = $region9
    $region8: #{tpu_custom_call.1} parent=1 // pred_region
      %20 = dma.done [#allocation3], 256
    $region9: #{tpu_custom_call.1} parent=1 // pred_fallthru
      _
    %v21 = vld [vmem:[#allocation2] sm:$0xff]
    %v22 = vld [vmem:[#allocation2 + $0x8] sm:$0xff]
    %v23 = vxor.u32 %v21, 2147483648
    %v24 = vxor.u32 %v22, 2147483648
    %v25 = vmul.f32 %v23, 1.442695
    %v26 = vpow.pop %v25
    %v27 = vmul.f32 %v24, 1.442695
    %v28 = vpow.pop %v27
    %v29 = vadd.f32 %v26, 1.0
    %v30 = vadd.f32 %v28, 1.0
    %v31 = vrcp.pop %v29
    %v32 = vmul.f32 1.0, %v31
    %v33 = vrcp.pop %v30
    %v34 = vmul.f32 1.0, %v33
    %35 = vst [vmem:[#allocation5] sm:$0xff] %v32
    %36 = vst [vmem:[#allocation5 + $0x8] sm:$0xff] %v34
    // Predicated region
    $region10: #{tpu_custom_call.1} parent=1 // pred_check
      _
    $region11: #{tpu_custom_call.1} parent=1 // pred_check_branch
      %38 = sbr.rel (0) target = $region13
    $region12: #{tpu_custom_call.1} parent=1 // pred_region
      %s40 = ssub.s32 256, 256
      %41 = vsyncadd [#allocation4], %s40
      %s43 = sshll.u32 [#allocation5], 4
      %s44 = int_to_ptr.vmem [resolvable:$true] %s43
      %46 = dma.vmem_to_hbm [thread:$0]  %s44, 256, %s1, [#allocation4]
    $region13: #{tpu_custom_call.1} parent=1 // pred_fallthru
      _
    // Predicated region
    $region14: #{tpu_custom_call.1} parent=1 // pred_check
      _
    $region15: #{tpu_custom_call.1} parent=1 // pred_check_branch
      %48 = sbr.rel (0) target = $region17
    $region16: #{tpu_custom_call.1} parent=1 // pred_region
      %49 = dma.done [#allocation4], 256
    $region17: #{tpu_custom_call.1} parent=1 // pred_fallthru
      _
    %50 = vsyncpa [#allocation3], 1
    %51 = vsyncpa [#allocation4], 1

</llo_original>
